<compile_context>
chip_gen: v5e
topology: v5e:2x2
jax: 0.10.0
libtpu: 0.0.40
codegen_flags: <defaults>
</compile_context>

<pallas_src>
import functools

import jax
import jax.numpy as jnp
import numpy as np
from jax import lax
from jax.experimental import pallas as pl
from jax.experimental.pallas import tpu as pltpu

# ---- model hyperparameters (small, consistent with the module) ----
B = 2            # batch
T = 8            # block_size (sequence length)
N_EMB = 32       # n_embeddings
N_HEADS = 4      # n_heads
HEAD_SIZE = 8    # head_size  (n_heads * head_size == n_embeddings)
DROPOUT = 0.0    # eval-mode: dropout is identity


def _multihead_kernel(x_ref, wqkv_ref, wpT_ref, bp_ref, o_ref, *,
                      batch: int, seq_len: int, n_heads: int, head_size: int):
    # x_ref:    (B*T, C)      whole batch, flattened along rows
    # wqkv_ref: (C, 3*C)      fused [Q_heads | K_heads | V_heads] projection weights
    # wpT_ref:  (C, C)        output-projection weight, transposed (cat @ WpT == Linear)
    # bp_ref:   (1, C)        output-projection bias
    # o_ref:    (B*T, C)
    C = n_heads * head_size
    scale = 1.0 / (head_size ** 0.5)

    x = x_ref[...]                                                     # (B*T, C)
    # Fused QKV projection: ONE MXU matmul for the whole batch.
    qkv = jnp.dot(x, wqkv_ref[...], preferred_element_type=jnp.float32)  # (B*T, 3*C)

    row = lax.broadcasted_iota(jnp.int32, (seq_len, seq_len), 0)
    col = lax.broadcasted_iota(jnp.int32, (seq_len, seq_len), 1)
    causal = col <= row                                                # lower-triangular mask

    wpT = wpT_ref[...]                                                 # (C, C)

    batch_outs = []
    for b in range(batch):                                             # static unroll (B small)
        r0 = b * seq_len
        acc = jnp.zeros((seq_len, C), jnp.float32)
        for h in range(n_heads):                                       # static unroll (n_heads small)
            c0 = h * head_size
            q = qkv[r0:r0 + seq_len, c0:c0 + head_size]                # (T, H)
            k = qkv[r0:r0 + seq_len, C + c0:C + c0 + head_size]        # (T, H)
            v = qkv[r0:r0 + seq_len, 2 * C + c0:2 * C + c0 + head_size]

            # q @ k^T without an explicit transpose (contract the last dims on the MXU).
            s = lax.dot_general(q, k, (((1,), (1,)), ((), ())),
                                preferred_element_type=jnp.float32) * scale  # (T, T)
            s = jnp.where(causal, s, -jnp.inf)
            m = jnp.max(s, axis=-1, keepdims=True)
            p = jnp.exp(s - m)
            l_inv = pl.reciprocal(jnp.sum(p, axis=-1, keepdims=True), approx=False)
            p = p * l_inv                                              # softmax

            head_out = jnp.dot(p, v, preferred_element_type=jnp.float32)  # (T, H)
            # Distribute the output projection into the head loop (no lane-concat):
            acc = acc + jnp.dot(head_out, wpT[c0:c0 + head_size, :],
                                preferred_element_type=jnp.float32)    # (T, C)
        batch_outs.append(acc)

    out = jnp.concatenate(batch_outs, axis=0) + bp_ref[...]            # (B*T, C), bias broadcast
    o_ref[...] = out.astype(o_ref.dtype)                               # single contiguous store


def multihead_forward(x, wq, wk, wv, wp, bp):
    """x: (B, T, C); wq/wk/wv: (n_heads, C, H); wp: (C, C) [torch layout]; bp: (C,)."""
    Bq, Tq, C = x.shape
    n_heads, _, H = wq.shape

    # Fuse per-head Q/K/V weights into a single (C, 3*C) operand:
    # columns [h*H:(h+1)*H] of each block correspond to head h.
    wq_all = jnp.transpose(wq, (1, 0, 2)).reshape(C, n_heads * H)
    wk_all = jnp.transpose(wk, (1, 0, 2)).reshape(C, n_heads * H)
    wv_all = jnp.transpose(wv, (1, 0, 2)).reshape(C, n_heads * H)
    wqkv = jnp.concatenate([wq_all, wk_all, wv_all], axis=1)           # (C, 3*C)

    wpT = wp.T                                                         # (C, C)
    bp2 = bp.reshape(1, C)
    x2d = x.reshape(Bq * Tq, C)

    kernel = functools.partial(_multihead_kernel, batch=Bq, seq_len=Tq,
                               n_heads=n_heads, head_size=H)

    out2d = pl.pallas_call(
        kernel,
        out_shape=jax.ShapeDtypeStruct((Bq * Tq, C), x.dtype),
        grid_spec=pltpu.PrefetchScalarGridSpec(
            num_scalar_prefetch=0,
            grid=(1,),                                                 # whole problem in one step
            in_specs=[
                pl.BlockSpec((Bq * Tq, C), lambda i: (0, 0)),
                pl.BlockSpec((C, 3 * C), lambda i: (0, 0)),
                pl.BlockSpec((C, C), lambda i: (0, 0)),
                pl.BlockSpec((1, C), lambda i: (0, 0)),
            ],
            out_specs=pl.BlockSpec((Bq * Tq, C), lambda i: (0, 0)),
        ),
        compiler_params=pltpu.CompilerParams(dimension_semantics=("arbitrary",)),
    )(x2d, wqkv, wpT, bp2)

    return out2d.reshape(Bq, Tq, C)


def multihead_reference(x, wq, wk, wv, wp, bp):
    """Pure-JAX reference matching the PyTorch module semantics (eval mode)."""
    Bq, Tq, C = x.shape
    H = wq.shape[-1]
    scale = 1.0 / (H ** 0.5)
    mask = jnp.tril(jnp.ones((Tq, Tq), dtype=bool))
    outs = []
    for h in range(wq.shape[0]):
        q = x @ wq[h]
        k = x @ wk[h]
        v = x @ wv[h]
        s = (q @ jnp.swapaxes(k, -1, -2)) * scale
        s = jnp.where(mask, s, -jnp.inf)
        p = jax.nn.softmax(s, axis=-1)
        outs.append(p @ v)
    cat = jnp.concatenate(outs, axis=-1)
    return cat @ wp.T + bp


if __name__ == "__main__":
    key = jax.random.PRNGKey(0)
    kx, kq, kk, kv, kp, kb = jax.random.split(key, 6)

    x = jax.random.normal(kx, (B, T, N_EMB), dtype=jnp.float32)

    # Deterministic synthetic parameters.
    # Per-head nn.Linear(n_emb, head_size, bias=False) weights, stored as (n_heads, C, H)
    # (i.e. the transpose of torch's (H, C) so that y = x @ W).
    wq = jax.random.normal(kq, (N_HEADS, N_EMB, HEAD_SIZE), dtype=jnp.float32) * 0.1
    wk = jax.random.normal(kk, (N_HEADS, N_EMB, HEAD_SIZE), dtype=jnp.float32) * 0.1
    wv = jax.random.normal(kv, (N_HEADS, N_EMB, HEAD_SIZE), dtype=jnp.float32) * 0.1
    # projection nn.Linear(n_emb, n_emb): torch layout (out, in) = (C, C), plus bias
    wp = jax.random.normal(kp, (N_EMB, N_EMB), dtype=jnp.float32) * 0.1
    bp = jax.random.normal(kb, (N_EMB,), dtype=jnp.float32) * 0.1

    out = multihead_forward(x, wq, wk, wv, wp, bp)
    out = jax.block_until_ready(out)

    ref = multihead_reference(x, wq, wk, wv, wp, bp)
    np.testing.assert_allclose(np.asarray(out), np.asarray(ref), rtol=1e-5, atol=1e-5)

    print("KERNEL_OK")
</pallas_src>

<mosaic_0001>
module attributes {stable_mosaic.version = 11 : i64} {
  func.func @_multihead_kernel(%arg0: i32, %arg1: memref<16x32xf32, #tpu.memory_space<vmem>>, %arg2: memref<32x96xf32, #tpu.memory_space<vmem>>, %arg3: memref<32x32xf32, #tpu.memory_space<vmem>>, %arg4: memref<1x32xf32, #tpu.memory_space<vmem>>, %arg5: memref<16x32xf32, #tpu.memory_space<vmem>>) attributes {dimension_semantics = [#tpu.dimension_semantics<arbitrary>], iteration_bounds = array<i64: 1>, scalar_prefetch = 0 : i64, scratch_operands = 0 : i64, tpu.core_type = #tpu.core_type<tc>, window_params = [{pipeline_mode = #tpu.pipeline_mode<synchronous>, transform_indices = @transform_0, window_bounds = array<i64: 16, 32>}, {pipeline_mode = #tpu.pipeline_mode<synchronous>, transform_indices = @transform_1, window_bounds = array<i64: 32, 96>}, {pipeline_mode = #tpu.pipeline_mode<synchronous>, transform_indices = @transform_2, window_bounds = array<i64: 32, 32>}, {pipeline_mode = #tpu.pipeline_mode<synchronous>, transform_indices = @transform_3, window_bounds = array<i64: 1, 32>}, {pipeline_mode = #tpu.pipeline_mode<synchronous>, transform_indices = @transform_4, window_bounds = array<i64: 16, 32>}]} {
    %c0 = arith.constant 0 : index
    %c0_0 = arith.constant 0 : index
    %0 = vector.load %arg1[%c0, %c0_0] : memref<16x32xf32, #tpu.memory_space<vmem>>, vector<16x32xf32>
    %c0_1 = arith.constant 0 : index
    %c0_2 = arith.constant 0 : index
    %1 = vector.load %arg2[%c0_1, %c0_2] : memref<32x96xf32, #tpu.memory_space<vmem>>, vector<32x96xf32>
    %cst = arith.constant dense<0.000000e+00> : vector<16x96xf32>
    %2 = tpu.matmul %0, %1, %cst {dimension_numbers = #tpu.dot_dimension_numbers<[1], [0], [0], [1], [0, 0, 1, 1], [], []>} : vector<16x32xf32>, vector<32x96xf32>, vector<16x96xf32> -> vector<16x96xf32>
    %3 = tpu.iota {dimensions = array<i32: 0>} : vector<8x8xi32>
    %4 = tpu.iota {dimensions = array<i32: 1>} : vector<8x8xi32>
    %5 = arith.cmpi sle, %4, %3 : vector<8x8xi32>
    %c0_3 = arith.constant 0 : index
    %c0_4 = arith.constant 0 : index
    %6 = vector.load %arg3[%c0_3, %c0_4] : memref<32x32xf32, #tpu.memory_space<vmem>>, vector<32x32xf32>
    %cst_5 = arith.constant 0.000000e+00 : f32
    %7 = vector.broadcast %cst_5 : f32 to vector<8x32xf32>
    %8 = vector.extract_strided_slice %2 {offsets = [0, 0], sizes = [8, 8], strides = [1, 1]} : vector<16x96xf32> to vector<8x8xf32>
    %9 = vector.extract_strided_slice %2 {offsets = [0, 32], sizes = [8, 8], strides = [1, 1]} : vector<16x96xf32> to vector<8x8xf32>
    %10 = vector.extract_strided_slice %2 {offsets = [0, 64], sizes = [8, 8], strides = [1, 1]} : vector<16x96xf32> to vector<8x8xf32>
    %cst_6 = arith.constant dense<0.000000e+00> : vector<8x8xf32>
    %11 = tpu.matmul %8, %9, %cst_6 {dimension_numbers = #tpu.dot_dimension_numbers<[1], [1], [0], [0], [0, 0, 1, 0], [], []>} : vector<8x8xf32>, vector<8x8xf32>, vector<8x8xf32> -> vector<8x8xf32>
    %cst_7 = arith.constant 0.353553385 : f32
    %12 = vector.broadcast %cst_7 : f32 to vector<8x8xf32>
    %13 = arith.mulf %11, %12 : vector<8x8xf32>
    %cst_8 = arith.constant 0xFF800000 : f32
    %14 = vector.broadcast %cst_8 : f32 to vector<8x8xf32>
    %15 = arith.select %5, %13, %14 : vector<8x8xi1>, vector<8x8xf32>
    %cst_9 = arith.constant dense<0xFF800000> : vector<8xf32>
    %16 = vector.multi_reduction <maximumf>, %15, %cst_9 [1] : vector<8x8xf32> to vector<8xf32>
    %17 = vector.shape_cast %16 : vector<8xf32> to vector<8x1xf32>
    %18 = vector.broadcast %17 : vector<8x1xf32> to vector<8x8xf32>
    %19 = arith.subf %15, %18 : vector<8x8xf32>
    %20 = math.exp %19 : vector<8x8xf32>
    %cst_10 = arith.constant dense<0.000000e+00> : vector<8xf32>
    %21 = vector.multi_reduction <add>, %20, %cst_10 [1] : vector<8x8xf32> to vector<8xf32>
    %22 = vector.shape_cast %21 : vector<8xf32> to vector<8x1xf32>
    %23 = tpu.reciprocal %22 : vector<8x1xf32> -> vector<8x1xf32>
    %24 = vector.broadcast %23 : vector<8x1xf32> to vector<8x8xf32>
    %25 = arith.mulf %20, %24 : vector<8x8xf32>
    %cst_11 = arith.constant dense<0.000000e+00> : vector<8x8xf32>
    %26 = tpu.matmul %25, %10, %cst_11 {dimension_numbers = #tpu.dot_dimension_numbers<[1], [0], [0], [1], [0, 0, 1, 1], [], []>} : vector<8x8xf32>, vector<8x8xf32>, vector<8x8xf32> -> vector<8x8xf32>
    %27 = vector.extract_strided_slice %6 {offsets = [0, 0], sizes = [8, 32], strides = [1, 1]} : vector<32x32xf32> to vector<8x32xf32>
    %cst_12 = arith.constant dense<0.000000e+00> : vector<8x32xf32>
    %28 = tpu.matmul %26, %27, %cst_12 {dimension_numbers = #tpu.dot_dimension_numbers<[1], [0], [0], [1], [0, 0, 1, 1], [], []>} : vector<8x8xf32>, vector<8x32xf32>, vector<8x32xf32> -> vector<8x32xf32>
    %29 = arith.addf %7, %28 : vector<8x32xf32>
    %30 = vector.extract_strided_slice %2 {offsets = [0, 8], sizes = [8, 8], strides = [1, 1]} : vector<16x96xf32> to vector<8x8xf32>
    %31 = vector.extract_strided_slice %2 {offsets = [0, 40], sizes = [8, 8], strides = [1, 1]} : vector<16x96xf32> to vector<8x8xf32>
    %32 = vector.extract_strided_slice %2 {offsets = [0, 72], sizes = [8, 8], strides = [1, 1]} : vector<16x96xf32> to vector<8x8xf32>
    %cst_13 = arith.constant dense<0.000000e+00> : vector<8x8xf32>
    %33 = tpu.matmul %30, %31, %cst_13 {dimension_numbers = #tpu.dot_dimension_numbers<[1], [1], [0], [0], [0, 0, 1, 0], [], []>} : vector<8x8xf32>, vector<8x8xf32>, vector<8x8xf32> -> vector<8x8xf32>
    %cst_14 = arith.constant 0.353553385 : f32
    %34 = vector.broadcast %cst_14 : f32 to vector<8x8xf32>
    %35 = arith.mulf %33, %34 : vector<8x8xf32>
    %cst_15 = arith.constant 0xFF800000 : f32
    %36 = vector.broadcast %cst_15 : f32 to vector<8x8xf32>
    %37 = arith.select %5, %35, %36 : vector<8x8xi1>, vector<8x8xf32>
    %cst_16 = arith.constant dense<0xFF800000> : vector<8xf32>
    %38 = vector.multi_reduction <maximumf>, %37, %cst_16 [1] : vector<8x8xf32> to vector<8xf32>
    %39 = vector.shape_cast %38 : vector<8xf32> to vector<8x1xf32>
    %40 = vector.broadcast %39 : vector<8x1xf32> to vector<8x8xf32>
    %41 = arith.subf %37, %40 : vector<8x8xf32>
    %42 = math.exp %41 : vector<8x8xf32>
    %cst_17 = arith.constant dense<0.000000e+00> : vector<8xf32>
    %43 = vector.multi_reduction <add>, %42, %cst_17 [1] : vector<8x8xf32> to vector<8xf32>
    %44 = vector.shape_cast %43 : vector<8xf32> to vector<8x1xf32>
    %45 = tpu.reciprocal %44 : vector<8x1xf32> -> vector<8x1xf32>
    %46 = vector.broadcast %45 : vector<8x1xf32> to vector<8x8xf32>
    %47 = arith.mulf %42, %46 : vector<8x8xf32>
    %cst_18 = arith.constant dense<0.000000e+00> : vector<8x8xf32>
    %48 = tpu.matmul %47, %32, %cst_18 {dimension_numbers = #tpu.dot_dimension_numbers<[1], [0], [0], [1], [0, 0, 1, 1], [], []>} : vector<8x8xf32>, vector<8x8xf32>, vector<8x8xf32> -> vector<8x8xf32>
    %49 = vector.extract_strided_slice %6 {offsets = [8, 0], sizes = [8, 32], strides = [1, 1]} : vector<32x32xf32> to vector<8x32xf32>
    %cst_19 = arith.constant dense<0.000000e+00> : vector<8x32xf32>
    %50 = tpu.matmul %48, %49, %cst_19 {dimension_numbers = #tpu.dot_dimension_numbers<[1], [0], [0], [1], [0, 0, 1, 1], [], []>} : vector<8x8xf32>, vector<8x32xf32>, vector<8x32xf32> -> vector<8x32xf32>
    %51 = arith.addf %29, %50 : vector<8x32xf32>
    %52 = vector.extract_strided_slice %2 {offsets = [0, 16], sizes = [8, 8], strides = [1, 1]} : vector<16x96xf32> to vector<8x8xf32>
    %53 = vector.extract_strided_slice %2 {offsets = [0, 48], sizes = [8, 8], strides = [1, 1]} : vector<16x96xf32> to vector<8x8xf32>
    %54 = vector.extract_strided_slice %2 {offsets = [0, 80], sizes = [8, 8], strides = [1, 1]} : vector<16x96xf32> to vector<8x8xf32>
    %cst_20 = arith.constant dense<0.000000e+00> : vector<8x8xf32>
    %55 = tpu.matmul %52, %53, %cst_20 {dimension_numbers = #tpu.dot_dimension_numbers<[1], [1], [0], [0], [0, 0, 1, 0], [], []>} : vector<8x8xf32>, vector<8x8xf32>, vector<8x8xf32> -> vector<8x8xf32>
    %cst_21 = arith.constant 0.353553385 : f32
    %56 = vector.broadcast %cst_21 : f32 to vector<8x8xf32>
    %57 = arith.mulf %55, %56 : vector<8x8xf32>
    %cst_22 = arith.constant 0xFF800000 : f32
    %58 = vector.broadcast %cst_22 : f32 to vector<8x8xf32>
    %59 = arith.select %5, %57, %58 : vector<8x8xi1>, vector<8x8xf32>
    %cst_23 = arith.constant dense<0xFF800000> : vector<8xf32>
    %60 = vector.multi_reduction <maximumf>, %59, %cst_23 [1] : vector<8x8xf32> to vector<8xf32>
    %61 = vector.shape_cast %60 : vector<8xf32> to vector<8x1xf32>
    %62 = vector.broadcast %61 : vector<8x1xf32> to vector<8x8xf32>
    %63 = arith.subf %59, %62 : vector<8x8xf32>
    %64 = math.exp %63 : vector<8x8xf32>
    %cst_24 = arith.constant dense<0.000000e+00> : vector<8xf32>
    %65 = vector.multi_reduction <add>, %64, %cst_24 [1] : vector<8x8xf32> to vector<8xf32>
    %66 = vector.shape_cast %65 : vector<8xf32> to vector<8x1xf32>
    %67 = tpu.reciprocal %66 : vector<8x1xf32> -> vector<8x1xf32>
    %68 = vector.broadcast %67 : vector<8x1xf32> to vector<8x8xf32>
    %69 = arith.mulf %64, %68 : vector<8x8xf32>
    %cst_25 = arith.constant dense<0.000000e+00> : vector<8x8xf32>
    %70 = tpu.matmul %69, %54, %cst_25 {dimension_numbers = #tpu.dot_dimension_numbers<[1], [0], [0], [1], [0, 0, 1, 1], [], []>} : vector<8x8xf32>, vector<8x8xf32>, vector<8x8xf32> -> vector<8x8xf32>
    %71 = vector.extract_strided_slice %6 {offsets = [16, 0], sizes = [8, 32], strides = [1, 1]} : vector<32x32xf32> to vector<8x32xf32>
    %cst_26 = arith.constant dense<0.000000e+00> : vector<8x32xf32>
    %72 = tpu.matmul %70, %71, %cst_26 {dimension_numbers = #tpu.dot_dimension_numbers<[1], [0], [0], [1], [0, 0, 1, 1], [], []>} : vector<8x8xf32>, vector<8x32xf32>, vector<8x32xf32> -> vector<8x32xf32>
    %73 = arith.addf %51, %72 : vector<8x32xf32>
    %74 = vector.extract_strided_slice %2 {offsets = [0, 24], sizes = [8, 8], strides = [1, 1]} : vector<16x96xf32> to vector<8x8xf32>
    %75 = vector.extract_strided_slice %2 {offsets = [0, 56], sizes = [8, 8], strides = [1, 1]} : vector<16x96xf32> to vector<8x8xf32>
    %76 = vector.extract_strided_slice %2 {offsets = [0, 88], sizes = [8, 8], strides = [1, 1]} : vector<16x96xf32> to vector<8x8xf32>
    %cst_27 = arith.constant dense<0.000000e+00> : vector<8x8xf32>
    %77 = tpu.matmul %74, %75, %cst_27 {dimension_numbers = #tpu.dot_dimension_numbers<[1], [1], [0], [0], [0, 0, 1, 0], [], []>} : vector<8x8xf32>, vector<8x8xf32>, vector<8x8xf32> -> vector<8x8xf32>
    %cst_28 = arith.constant 0.353553385 : f32
    %78 = vector.broadcast %cst_28 : f32 to vector<8x8xf32>
    %79 = arith.mulf %77, %78 : vector<8x8xf32>
    %cst_29 = arith.constant 0xFF800000 : f32
    %80 = vector.broadcast %cst_29 : f32 to vector<8x8xf32>
    %81 = arith.select %5, %79, %80 : vector<8x8xi1>, vector<8x8xf32>
    %cst_30 = arith.constant dense<0xFF800000> : vector<8xf32>
    %82 = vector.multi_reduction <maximumf>, %81, %cst_30 [1] : vector<8x8xf32> to vector<8xf32>
    %83 = vector.shape_cast %82 : vector<8xf32> to vector<8x1xf32>
    %84 = vector.broadcast %83 : vector<8x1xf32> to vector<8x8xf32>
    %85 = arith.subf %81, %84 : vector<8x8xf32>
    %86 = math.exp %85 : vector<8x8xf32>
    %cst_31 = arith.constant dense<0.000000e+00> : vector<8xf32>
    %87 = vector.multi_reduction <add>, %86, %cst_31 [1] : vector<8x8xf32> to vector<8xf32>
    %88 = vector.shape_cast %87 : vector<8xf32> to vector<8x1xf32>
    %89 = tpu.reciprocal %88 : vector<8x1xf32> -> vector<8x1xf32>
    %90 = vector.broadcast %89 : vector<8x1xf32> to vector<8x8xf32>
    %91 = arith.mulf %86, %90 : vector<8x8xf32>
    %cst_32 = arith.constant dense<0.000000e+00> : vector<8x8xf32>
    %92 = tpu.matmul %91, %76, %cst_32 {dimension_numbers = #tpu.dot_dimension_numbers<[1], [0], [0], [1], [0, 0, 1, 1], [], []>} : vector<8x8xf32>, vector<8x8xf32>, vector<8x8xf32> -> vector<8x8xf32>
    %93 = vector.extract_strided_slice %6 {offsets = [24, 0], sizes = [8, 32], strides = [1, 1]} : vector<32x32xf32> to vector<8x32xf32>
    %cst_33 = arith.constant dense<0.000000e+00> : vector<8x32xf32>
    %94 = tpu.matmul %92, %93, %cst_33 {dimension_numbers = #tpu.dot_dimension_numbers<[1], [0], [0], [1], [0, 0, 1, 1], [], []>} : vector<8x8xf32>, vector<8x32xf32>, vector<8x32xf32> -> vector<8x32xf32>
    %95 = arith.addf %73, %94 : vector<8x32xf32>
    %cst_34 = arith.constant 0.000000e+00 : f32
    %96 = vector.broadcast %cst_34 : f32 to vector<8x32xf32>
    %97 = vector.extract_strided_slice %2 {offsets = [8, 0], sizes = [8, 8], strides = [1, 1]} : vector<16x96xf32> to vector<8x8xf32>
    %98 = vector.extract_strided_slice %2 {offsets = [8, 32], sizes = [8, 8], strides = [1, 1]} : vector<16x96xf32> to vector<8x8xf32>
    %99 = vector.extract_strided_slice %2 {offsets = [8, 64], sizes = [8, 8], strides = [1, 1]} : vector<16x96xf32> to vector<8x8xf32>
    %cst_35 = arith.constant dense<0.000000e+00> : vector<8x8xf32>
    %100 = tpu.matmul %97, %98, %cst_35 {dimension_numbers = #tpu.dot_dimension_numbers<[1], [1], [0], [0], [0, 0, 1, 0], [], []>} : vector<8x8xf32>, vector<8x8xf32>, vector<8x8xf32> -> vector<8x8xf32>
    %cst_36 = arith.constant 0.353553385 : f32
    %101 = vector.broadcast %cst_36 : f32 to vector<8x8xf32>
    %102 = arith.mulf %100, %101 : vector<8x8xf32>
    %cst_37 = arith.constant 0xFF800000 : f32
    %103 = vector.broadcast %cst_37 : f32 to vector<8x8xf32>
    %104 = arith.select %5, %102, %103 : vector<8x8xi1>, vector<8x8xf32>
    %cst_38 = arith.constant dense<0xFF800000> : vector<8xf32>
    %105 = vector.multi_reduction <maximumf>, %104, %cst_38 [1] : vector<8x8xf32> to vector<8xf32>
    %106 = vector.shape_cast %105 : vector<8xf32> to vector<8x1xf32>
    %107 = vector.broadcast %106 : vector<8x1xf32> to vector<8x8xf32>
    %108 = arith.subf %104, %107 : vector<8x8xf32>
    %109 = math.exp %108 : vector<8x8xf32>
    %cst_39 = arith.constant dense<0.000000e+00> : vector<8xf32>
    %110 = vector.multi_reduction <add>, %109, %cst_39 [1] : vector<8x8xf32> to vector<8xf32>
    %111 = vector.shape_cast %110 : vector<8xf32> to vector<8x1xf32>
    %112 = tpu.reciprocal %111 : vector<8x1xf32> -> vector<8x1xf32>
    %113 = vector.broadcast %112 : vector<8x1xf32> to vector<8x8xf32>
    %114 = arith.mulf %109, %113 : vector<8x8xf32>
    %cst_40 = arith.constant dense<0.000000e+00> : vector<8x8xf32>
    %115 = tpu.matmul %114, %99, %cst_40 {dimension_numbers = #tpu.dot_dimension_numbers<[1], [0], [0], [1], [0, 0, 1, 1], [], []>} : vector<8x8xf32>, vector<8x8xf32>, vector<8x8xf32> -> vector<8x8xf32>
    %116 = vector.extract_strided_slice %6 {offsets = [0, 0], sizes = [8, 32], strides = [1, 1]} : vector<32x32xf32> to vector<8x32xf32>
    %cst_41 = arith.constant dense<0.000000e+00> : vector<8x32xf32>
    %117 = tpu.matmul %115, %116, %cst_41 {dimension_numbers = #tpu.dot_dimension_numbers<[1], [0], [0], [1], [0, 0, 1, 1], [], []>} : vector<8x8xf32>, vector<8x32xf32>, vector<8x32xf32> -> vector<8x32xf32>
    %118 = arith.addf %96, %117 : vector<8x32xf32>
    %119 = vector.extract_strided_slice %2 {offsets = [8, 8], sizes = [8, 8], strides = [1, 1]} : vector<16x96xf32> to vector<8x8xf32>
    %120 = vector.extract_strided_slice %2 {offsets = [8, 40], sizes = [8, 8], strides = [1, 1]} : vector<16x96xf32> to vector<8x8xf32>
    %121 = vector.extract_strided_slice %2 {offsets = [8, 72], sizes = [8, 8], strides = [1, 1]} : vector<16x96xf32> to vector<8x8xf32>
    %cst_42 = arith.constant dense<0.000000e+00> : vector<8x8xf32>
    %122 = tpu.matmul %119, %120, %cst_42 {dimension_numbers = #tpu.dot_dimension_numbers<[1], [1], [0], [0], [0, 0, 1, 0], [], []>} : vector<8x8xf32>, vector<8x8xf32>, vector<8x8xf32> -> vector<8x8xf32>
    %cst_43 = arith.constant 0.353553385 : f32
    %123 = vector.broadcast %cst_43 : f32 to vector<8x8xf32>
    %124 = arith.mulf %122, %123 : vector<8x8xf32>
    %cst_44 = arith.constant 0xFF800000 : f32
    %125 = vector.broadcast %cst_44 : f32 to vector<8x8xf32>
    %126 = arith.select %5, %124, %125 : vector<8x8xi1>, vector<8x8xf32>
    %cst_45 = arith.constant dense<0xFF800000> : vector<8xf32>
    %127 = vector.multi_reduction <maximumf>, %126, %cst_45 [1] : vector<8x8xf32> to vector<8xf32>
    %128 = vector.shape_cast %127 : vector<8xf32> to vector<8x1xf32>
    %129 = vector.broadcast %128 : vector<8x1xf32> to vector<8x8xf32>
    %130 = arith.subf %126, %129 : vector<8x8xf32>
    %131 = math.exp %130 : vector<8x8xf32>
    %cst_46 = arith.constant dense<0.000000e+00> : vector<8xf32>
    %132 = vector.multi_reduction <add>, %131, %cst_46 [1] : vector<8x8xf32> to vector<8xf32>
    %133 = vector.shape_cast %132 : vector<8xf32> to vector<8x1xf32>
    %134 = tpu.reciprocal %133 : vector<8x1xf32> -> vector<8x1xf32>
    %135 = vector.broadcast %134 : vector<8x1xf32> to vector<8x8xf32>
    %136 = arith.mulf %131, %135 : vector<8x8xf32>
    %cst_47 = arith.constant dense<0.000000e+00> : vector<8x8xf32>
    %137 = tpu.matmul %136, %121, %cst_47 {dimension_numbers = #tpu.dot_dimension_numbers<[1], [0], [0], [1], [0, 0, 1, 1], [], []>} : vector<8x8xf32>, vector<8x8xf32>, vector<8x8xf32> -> vector<8x8xf32>
    %138 = vector.extract_strided_slice %6 {offsets = [8, 0], sizes = [8, 32], strides = [1, 1]} : vector<32x32xf32> to vector<8x32xf32>
    %cst_48 = arith.constant dense<0.000000e+00> : vector<8x32xf32>
    %139 = tpu.matmul %137, %138, %cst_48 {dimension_numbers = #tpu.dot_dimension_numbers<[1], [0], [0], [1], [0, 0, 1, 1], [], []>} : vector<8x8xf32>, vector<8x32xf32>, vector<8x32xf32> -> vector<8x32xf32>
    %140 = arith.addf %118, %139 : vector<8x32xf32>
    %141 = vector.extract_strided_slice %2 {offsets = [8, 16], sizes = [8, 8], strides = [1, 1]} : vector<16x96xf32> to vector<8x8xf32>
    %142 = vector.extract_strided_slice %2 {offsets = [8, 48], sizes = [8, 8], strides = [1, 1]} : vector<16x96xf32> to vector<8x8xf32>
    %143 = vector.extract_strided_slice %2 {offsets = [8, 80], sizes = [8, 8], strides = [1, 1]} : vector<16x96xf32> to vector<8x8xf32>
    %cst_49 = arith.constant dense<0.000000e+00> : vector<8x8xf32>
    %144 = tpu.matmul %141, %142, %cst_49 {dimension_numbers = #tpu.dot_dimension_numbers<[1], [1], [0], [0], [0, 0, 1, 0], [], []>} : vector<8x8xf32>, vector<8x8xf32>, vector<8x8xf32> -> vector<8x8xf32>
    %cst_50 = arith.constant 0.353553385 : f32
    %145 = vector.broadcast %cst_50 : f32 to vector<8x8xf32>
    %146 = arith.mulf %144, %145 : vector<8x8xf32>
    %cst_51 = arith.constant 0xFF800000 : f32
    %147 = vector.broadcast %cst_51 : f32 to vector<8x8xf32>
    %148 = arith.select %5, %146, %147 : vector<8x8xi1>, vector<8x8xf32>
    %cst_52 = arith.constant dense<0xFF800000> : vector<8xf32>
    %149 = vector.multi_reduction <maximumf>, %148, %cst_52 [1] : vector<8x8xf32> to vector<8xf32>
    %150 = vector.shape_cast %149 : vector<8xf32> to vector<8x1xf32>
    %151 = vector.broadcast %150 : vector<8x1xf32> to vector<8x8xf32>
    %152 = arith.subf %148, %151 : vector<8x8xf32>
    %153 = math.exp %152 : vector<8x8xf32>
    %cst_53 = arith.constant dense<0.000000e+00> : vector<8xf32>
    %154 = vector.multi_reduction <add>, %153, %cst_53 [1] : vector<8x8xf32> to vector<8xf32>
    %155 = vector.shape_cast %154 : vector<8xf32> to vector<8x1xf32>
    %156 = tpu.reciprocal %155 : vector<8x1xf32> -> vector<8x1xf32>
    %157 = vector.broadcast %156 : vector<8x1xf32> to vector<8x8xf32>
    %158 = arith.mulf %153, %157 : vector<8x8xf32>
    %cst_54 = arith.constant dense<0.000000e+00> : vector<8x8xf32>
    %159 = tpu.matmul %158, %143, %cst_54 {dimension_numbers = #tpu.dot_dimension_numbers<[1], [0], [0], [1], [0, 0, 1, 1], [], []>} : vector<8x8xf32>, vector<8x8xf32>, vector<8x8xf32> -> vector<8x8xf32>
    %160 = vector.extract_strided_slice %6 {offsets = [16, 0], sizes = [8, 32], strides = [1, 1]} : vector<32x32xf32> to vector<8x32xf32>
    %cst_55 = arith.constant dense<0.000000e+00> : vector<8x32xf32>
    %161 = tpu.matmul %159, %160, %cst_55 {dimension_numbers = #tpu.dot_dimension_numbers<[1], [0], [0], [1], [0, 0, 1, 1], [], []>} : vector<8x8xf32>, vector<8x32xf32>, vector<8x32xf32> -> vector<8x32xf32>
    %162 = arith.addf %140, %161 : vector<8x32xf32>
    %163 = vector.extract_strided_slice %2 {offsets = [8, 24], sizes = [8, 8], strides = [1, 1]} : vector<16x96xf32> to vector<8x8xf32>
    %164 = vector.extract_strided_slice %2 {offsets = [8, 56], sizes = [8, 8], strides = [1, 1]} : vector<16x96xf32> to vector<8x8xf32>
    %165 = vector.extract_strided_slice %2 {offsets = [8, 88], sizes = [8, 8], strides = [1, 1]} : vector<16x96xf32> to vector<8x8xf32>
    %cst_56 = arith.constant dense<0.000000e+00> : vector<8x8xf32>
    %166 = tpu.matmul %163, %164, %cst_56 {dimension_numbers = #tpu.dot_dimension_numbers<[1], [1], [0], [0], [0, 0, 1, 0], [], []>} : vector<8x8xf32>, vector<8x8xf32>, vector<8x8xf32> -> vector<8x8xf32>
    %cst_57 = arith.constant 0.353553385 : f32
    %167 = vector.broadcast %cst_57 : f32 to vector<8x8xf32>
    %168 = arith.mulf %166, %167 : vector<8x8xf32>
    %cst_58 = arith.constant 0xFF800000 : f32
    %169 = vector.broadcast %cst_58 : f32 to vector<8x8xf32>
    %170 = arith.select %5, %168, %169 : vector<8x8xi1>, vector<8x8xf32>
    %cst_59 = arith.constant dense<0xFF800000> : vector<8xf32>
    %171 = vector.multi_reduction <maximumf>, %170, %cst_59 [1] : vector<8x8xf32> to vector<8xf32>
    %172 = vector.shape_cast %171 : vector<8xf32> to vector<8x1xf32>
    %173 = vector.broadcast %172 : vector<8x1xf32> to vector<8x8xf32>
    %174 = arith.subf %170, %173 : vector<8x8xf32>
    %175 = math.exp %174 : vector<8x8xf32>
    %cst_60 = arith.constant dense<0.000000e+00> : vector<8xf32>
    %176 = vector.multi_reduction <add>, %175, %cst_60 [1] : vector<8x8xf32> to vector<8xf32>
    %177 = vector.shape_cast %176 : vector<8xf32> to vector<8x1xf32>
    %178 = tpu.reciprocal %177 : vector<8x1xf32> -> vector<8x1xf32>
    %179 = vector.broadcast %178 : vector<8x1xf32> to vector<8x8xf32>
    %180 = arith.mulf %175, %179 : vector<8x8xf32>
    %cst_61 = arith.constant dense<0.000000e+00> : vector<8x8xf32>
    %181 = tpu.matmul %180, %165, %cst_61 {dimension_numbers = #tpu.dot_dimension_numbers<[1], [0], [0], [1], [0, 0, 1, 1], [], []>} : vector<8x8xf32>, vector<8x8xf32>, vector<8x8xf32> -> vector<8x8xf32>
    %182 = vector.extract_strided_slice %6 {offsets = [24, 0], sizes = [8, 32], strides = [1, 1]} : vector<32x32xf32> to vector<8x32xf32>
    %cst_62 = arith.constant dense<0.000000e+00> : vector<8x32xf32>
    %183 = tpu.matmul %181, %182, %cst_62 {dimension_numbers = #tpu.dot_dimension_numbers<[1], [0], [0], [1], [0, 0, 1, 1], [], []>} : vector<8x8xf32>, vector<8x32xf32>, vector<8x32xf32> -> vector<8x32xf32>
    %184 = arith.addf %162, %183 : vector<8x32xf32>
    %185 = tpu.concatenate %95, %184 in 0 : vector<8x32xf32>, vector<8x32xf32> -> vector<16x32xf32>
    %c0_63 = arith.constant 0 : index
    %c0_64 = arith.constant 0 : index
    %186 = vector.load %arg4[%c0_63, %c0_64] : memref<1x32xf32, #tpu.memory_space<vmem>>, vector<1x32xf32>
    %187 = vector.broadcast %186 : vector<1x32xf32> to vector<16x32xf32>
    %188 = arith.addf %185, %187 : vector<16x32xf32>
    %c0_65 = arith.constant 0 : index
    %c0_66 = arith.constant 0 : index
    %189 = vector.load %arg5[%c0_65, %c0_66] : memref<16x32xf32, #tpu.memory_space<vmem>>, vector<16x32xf32>
    tpu.vector_store %arg5[%c0_65, %c0_66], %188 {strides = array<i32>} : memref<16x32xf32, #tpu.memory_space<vmem>>, vector<16x32xf32>,
    return
  }
  func.func @transform_0(%arg0: i32) -> (i32, i32) {
    %c0_i32 = arith.constant 0 : i32
    %c0_i32_0 = arith.constant 0 : i32
    %c0_i32_1 = arith.constant 0 : i32
    return %c0_i32, %c0_i32_0 : i32, i32
  }
  func.func @transform_1(%arg0: i32) -> (i32, i32) {
    %c0_i32 = arith.constant 0 : i32
    %c0_i32_0 = arith.constant 0 : i32
    %c0_i32_1 = arith.constant 0 : i32
    return %c0_i32, %c0_i32_0 : i32, i32
  }
  func.func @transform_2(%arg0: i32) -> (i32, i32) {
    %c0_i32 = arith.constant 0 : i32
    %c0_i32_0 = arith.constant 0 : i32
    %c0_i32_1 = arith.constant 0 : i32
    return %c0_i32, %c0_i32_0 : i32, i32
  }
  func.func @transform_3(%arg0: i32) -> (i32, i32) {
    %c0_i32 = arith.constant 0 : i32
    %c0_i32_0 = arith.constant 0 : i32
    %c0_i32_1 = arith.constant 0 : i32
    return %c0_i32, %c0_i32_0 : i32, i32
  }
  func.func @transform_4(%arg0: i32) -> (i32, i32) {
    %c0_i32 = arith.constant 0 : i32
    %c0_i32_0 = arith.constant 0 : i32
    %c0_i32_1 = arith.constant 0 : i32
    return %c0_i32, %c0_i32_0 : i32, i32
  }
}

</mosaic_0001>

<llo_original>
// kernel: tpu_custom_call.1
$region0: #{tpu_custom_call.1}
  #allocation0 [shape = 'u32[]', space=smem, size = 0x4, offset = 0x4, fixed_abs, tag = 'smem constant byte address 0x4 - core index']
  #allocation1 [shape = 'u32[72,128]{1,0:T(1,128)}', space=vmem, size = 0x9000, scoped, tag = 'internal scratch']
  %s0 = inlined_call_operand.hbm [shape: f32[16,32], index: 0, kind: input, shape index: {}]
  %s1 = inlined_call_operand.hbm [shape: f32[32,96], index: 1, kind: input, shape index: {}]
  %s2 = inlined_call_operand.hbm [shape: f32[32,32], index: 2, kind: input, shape index: {}]
  %s3 = inlined_call_operand.vmem [shape: f32[1,32], index: 3, kind: input, shape index: {}]
  %s4 = inlined_call_operand.hbm [shape: f32[16,32], index: 4, kind: output, shape index: {}]
  %s5 = sld [smem:[#allocation0]]
  $region38: #{tpu_custom_call.1} parent=0
    _
  %s7 = ssub.s32 1, %s5
  %s8 = scalar_select 0, %s7, %s5
  $region1: #{tpu_custom_call.1} parent=0
    #allocation2 [shape = 'u8[8192]{0}', space=vmem, size = 0x2000, scoped, tag = 'input window, operand 0, single buffered']
    #allocation3 [shape = 's32[1]{0}', space=sflag, size = 0x4, scoped, tag = 'scoped memory for tpu_custom_call.1']
    #allocation4 [shape = 's32[1]{0}', space=sflag, size = 0x4, scoped, tag = 'scoped memory for tpu_custom_call.1']
    #allocation5 [shape = 'u8[16384]{0}', space=vmem, size = 0x4000, scoped, tag = 'input window, operand 1, single buffered']
    #allocation6 [shape = 's32[1]{0}', space=sflag, size = 0x4, scoped, tag = 'scoped memory for tpu_custom_call.1']
    #allocation7 [shape = 'u8[16384]{0}', space=vmem, size = 0x4000, scoped, tag = 'input window, operand 2, single buffered']
    #allocation8 [shape = 'u8[8192]{0}', space=vmem, size = 0x2000, scoped, tag = 'output window, operand 0, single buffered']
    %9 = vsyncpa [#allocation3], 0
    %10 = vsyncpa [#allocation6], 0
    %11 = vsyncpa [#allocation4], 0
    // Predicated region
    $region2: #{tpu_custom_call.1} parent=1 // pred_check
      _
    $region3: #{tpu_custom_call.1} parent=1 // pred_check_branch
      %13 = sbr.rel (0) target = $region5
    $region4: #{tpu_custom_call.1} parent=1 // pred_region
      %15 = vsyncadd [#allocation3], 0
      %s16 = sshll.u32 %s0, 4
      %s17 = int_to_ptr.hbm [resolvable:$true] %s16
      %s18 = sshll.u32 [#allocation2], 4
      %s19 = int_to_ptr.vmem [resolvable:$true] %s18
      %24 = dma.hbm_to_vmem [thread:$0]  %s17, 256, %s19, [#allocation3], 128, 128, 8
    $region5: #{tpu_custom_call.1} parent=1 // pred_fallthru
      _
    // Predicated region
    $region6: #{tpu_custom_call.1} parent=1 // pred_check
      _
    $region7: #{tpu_custom_call.1} parent=1 // pred_check_branch
      %26 = sbr.rel (0) target = $region9
    $region8: #{tpu_custom_call.1} parent=1 // pred_region
      %28 = vsyncadd [#allocation6], 0
      %s29 = sshll.u32 %s1, 4
      %s30 = int_to_ptr.hbm [resolvable:$true] %s29
      %s31 = sshll.u32 [#allocation5], 4
      %s32 = int_to_ptr.vmem [resolvable:$true] %s31
      %37 = dma.hbm_to_vmem [thread:$0]  %s30, 512, %s32, [#allocation6], 128, 128, 8
    $region9: #{tpu_custom_call.1} parent=1 // pred_fallthru
      _
    // Predicated region
    $region10: #{tpu_custom_call.1} parent=1 // pred_check
      _
    $region11: #{tpu_custom_call.1} parent=1 // pred_check_branch
      %39 = sbr.rel (0) target = $region13
    $region12: #{tpu_custom_call.1} parent=1 // pred_region
      %41 = vsyncadd [#allocation6], 0
      %s42 = sshll.u32 %s2, 4
      %s43 = int_to_ptr.hbm [resolvable:$true] %s42
      %s44 = sshll.u32 [#allocation7], 4
      %s45 = int_to_ptr.vmem [resolvable:$true] %s44
      %50 = dma.hbm_to_vmem [thread:$0]  %s43, 512, %s45, [#allocation6], 128, 128, 8
    $region13: #{tpu_custom_call.1} parent=1 // pred_fallthru
      _
    // Predicated region
    $region14: #{tpu_custom_call.1} parent=1 // pred_check
      _
    $region15: #{tpu_custom_call.1} parent=1 // pred_check_branch
      %52 = sbr.rel (0) target = $region17
    $region16: #{tpu_custom_call.1} parent=1 // pred_region
      _
    $region17: #{tpu_custom_call.1} parent=1 // pred_fallthru
      _
    // Predicated region
    $region18: #{tpu_custom_call.1} parent=1 // pred_check
      _
    $region19: #{tpu_custom_call.1} parent=1 // pred_check_branch
      %54 = sbr.rel (0) target = $region21
    $region20: #{tpu_custom_call.1} parent=1 // pred_region
      %56 = dma.done [#allocation3], 256
    $region21: #{tpu_custom_call.1} parent=1 // pred_fallthru
      _
    // Predicated region
    $region22: #{tpu_custom_call.1} parent=1 // pred_check
      _
    $region23: #{tpu_custom_call.1} parent=1 // pred_check_branch
      %58 = sbr.rel (0) target = $region25
    $region24: #{tpu_custom_call.1} parent=1 // pred_region
      %60 = dma.done [#allocation6], 512
    $region25: #{tpu_custom_call.1} parent=1 // pred_fallthru
      _
    // Predicated region
    $region26: #{tpu_custom_call.1} parent=1 // pred_check
      _
    $region27: #{tpu_custom_call.1} parent=1 // pred_check_branch
      %62 = sbr.rel (0) target = $region29
    $region28: #{tpu_custom_call.1} parent=1 // pred_region
      %64 = dma.done [#allocation6], 512
    $region29: #{tpu_custom_call.1} parent=1 // pred_fallthru
      _
    %v65 = vld [vmem:[#allocation2] sm:$0xff]
    %v66 = vld [vmem:[#allocation2 + $0x8] sm:$0xff]
    %v67 = vld [vmem:[#allocation5] sm:$0xff]
    %v68 = vld [vmem:[#allocation5 + $0x8] sm:$0xff]
    %v69 = vld [vmem:[#allocation5 + $0x10] sm:$0xff]
    %v70 = vld [vmem:[#allocation5 + $0x18] sm:$0xff]
    %vm71 = vcmask 261120
    %v73 = vsel %vm71, %v65, 0
    %v76 = vsel %vm71, %v66, 0
    %78 = vmatpush.msra.mxu0 0.0
    %79 = vmatpush.msra.mxu0 0.0
    %80 = vmatpush.msra.mxu0 0.0
    %81 = vmatpush.msra.mxu0 0.0
    %82 = vmatpush.msra.mxu0 0.0
    %83 = vmatpush.msra.mxu0 0.0
    %84 = vmatpush.msra.mxu0 0.0
    %85 = vmatpush.msra.mxu0 0.0
    %86 = vmatpush.msra.mxu0 0.0
    %87 = vmatpush.msra.mxu0 0.0
    %88 = vmatpush.msra.mxu0 0.0
    %89 = vmatpush.msra.mxu0 0.0
    %90 = vmatpush.msra.mxu0 %v70
    %91 = vmatpush.msra.mxu0 %v69
    %92 = vmatpush.msra.mxu0 %v68
    %93 = vmatpush.msra.mxu0 %v67
    %94 = vmatmul.f32.gmra.mxu0 %v73
    %v95 = vpop.f32.mrf.mxu0
    %v96 = vadd.f32 0.0, %v95
    %97 = vmatmul.f32.gmra.mxu0 %v76
    %v98 = vpop.f32.mrf.mxu0
    %v99 = vadd.f32 0.0, %v98
    %100 = vdwg.mxu0
    %v101 = vlaneseq
    %v102 = vshrl.u32 %v101, 7
    %v103 = vlaneseq
    %v104 = vand.u32 %v103, 127
    %vm105 = vcmp.le.s32.totalorder %v104, %v102
    %v106 = vld [vmem:[#allocation7] sm:$0xff]
    %v107 = vld [vmem:[#allocation7 + $0x8] sm:$0xff]
    %v108 = vld [vmem:[#allocation7 + $0x10] sm:$0xff]
    %v109 = vld [vmem:[#allocation7 + $0x18] sm:$0xff]
    %111 = vrot.lane.b32.xlu0 %v96, 96
    %v112 = vpop.permute.xlu0 %111
    %vm113 = vcmask 64512
    %v114 = vsel %vm113, %v96, 0
    %v116 = vsel %vm113, %v112, 0
    %118 = vmatpush.xpose.msra.mxu0 0.0
    %119 = vmatpush.xpose.msra.mxu0 0.0
    %120 = vmatpush.xpose.msra.mxu0 0.0
    %121 = vmatpush.xpose.msra.mxu0 0.0
    %122 = vmatpush.xpose.msra.mxu0 0.0
    %123 = vmatpush.xpose.msra.mxu0 0.0
    %124 = vmatpush.xpose.msra.mxu0 0.0
    %125 = vmatpush.xpose.msra.mxu0 0.0
    %126 = vmatpush.xpose.msra.mxu0 0.0
    %127 = vmatpush.xpose.msra.mxu0 0.0
    %128 = vmatpush.xpose.msra.mxu0 0.0
    %129 = vmatpush.xpose.msra.mxu0 0.0
    %130 = vmatpush.xpose.msra.mxu0 0.0
    %131 = vmatpush.xpose.msra.mxu0 0.0
    %132 = vmatpush.xpose.msra.mxu0 0.0
    %133 = vmatpush.xpose.msra.mxu0 %v116
    %134 = vmatmul.f32.gmra.mxu0 %v114
    %v135 = vpop.f32.mrf.mxu0
    %v136 = vadd.f32 0.0, %v135
    %137 = vdwg.mxu0
    %v138 = vmul.f32 %v136, 0.35355338
    %v139 = vsel %vm105, %v138, -inf
    %v140 = vsel %vm113, %v139, -inf
    %141 = vmax.xlane.f32.xlu0 %v140
    %v142 = vpop.xlane.xlu0 %141
    %v143 = vsub.f32 %v139, %v142
    %v144 = vmul.f32 %v143, 1.442695
    %v145 = vpow.pop %v144
    %v146 = vsel %vm113, %v145, 0.0
    %147 = vadd.xlane.f32.xlu0 %v146
    %v148 = vpop.xlane.xlu0 %147
    %v149 = vrcp.pop %v148
    %v150 = vmul.f32 %v148, %v149
    %v151 = vsub.f32 1.0, %v150
    %v152 = vmul.f32 %v149, %v151
    %v153 = vadd.f32 %v149, %v152
    %vm154 = vweird.f32 %v148
    %vm155 = vweird.f32 %v149
    %vm156 = vmor %vm154, %vm155
    %v157 = vsel %vm156, %v149, %v153
    %v158 = vand.u32 2147483647, %v148
    %vm159 = vcmp.eq.f32.partialorder %v158, 8.507059e+37
    %v160 = vand.u32 %v148, 2147483648
    %v161 = vor.u32 1.1754944e-38, %v160
    %v162 = vsel %vm159, %v161, %v157
    %v163 = vmul.f32 %v145, %v162
    %164 = vrot.lane.b32.xlu0 %v96, 64
    %v165 = vpop.permute.xlu0 %164
    %v168 = vsel %vm113, %v163, 0
    %170 = vmatpush.msra.mxu0 0.0
    %171 = vmatpush.msra.mxu0 0.0
    %172 = vmatpush.msra.mxu0 0.0
    %173 = vmatpush.msra.mxu0 0.0
    %174 = vmatpush.msra.mxu0 0.0
    %175 = vmatpush.msra.mxu0 0.0
    %176 = vmatpush.msra.mxu0 0.0
    %177 = vmatpush.msra.mxu0 0.0
    %178 = vmatpush.msra.mxu0 0.0
    %179 = vmatpush.msra.mxu0 0.0
    %180 = vmatpush.msra.mxu0 0.0
    %181 = vmatpush.msra.mxu0 0.0
    %182 = vmatpush.msra.mxu0 0.0
    %183 = vmatpush.msra.mxu0 0.0
    %184 = vmatpush.msra.mxu0 0.0
    %185 = vmatpush.msra.mxu0 %v165
    %186 = vmatmul.f32.gmra.mxu0 %v168
    %v187 = vpop.f32.mrf.mxu0
    %v188 = vadd.f32 0.0, %v187
    %189 = vdwg.mxu0
    %190 = vrot.lane.b32.xlu0 %v96, 120
    %v191 = vpop.permute.xlu0 %190
    %192 = vrot.lane.b32.xlu0 %v96, 88
    %v193 = vpop.permute.xlu0 %192
    %v194 = vsel %vm113, %v191, 0
    %v196 = vsel %vm113, %v193, 0
    %198 = vmatpush.xpose.msra.mxu0 0.0
    %199 = vmatpush.xpose.msra.mxu0 0.0
    %200 = vmatpush.xpose.msra.mxu0 0.0
    %201 = vmatpush.xpose.msra.mxu0 0.0
    %202 = vmatpush.xpose.msra.mxu0 0.0
    %203 = vmatpush.xpose.msra.mxu0 0.0
    %204 = vmatpush.xpose.msra.mxu0 0.0
    %205 = vmatpush.xpose.msra.mxu0 0.0
    %206 = vmatpush.xpose.msra.mxu0 0.0
    %207 = vmatpush.xpose.msra.mxu0 0.0
    %208 = vmatpush.xpose.msra.mxu0 0.0
    %209 = vmatpush.xpose.msra.mxu0 0.0
    %210 = vmatpush.xpose.msra.mxu0 0.0
    %211 = vmatpush.xpose.msra.mxu0 0.0
    %212 = vmatpush.xpose.msra.mxu0 0.0
    %213 = vmatpush.xpose.msra.mxu0 %v196
    %214 = vmatmul.f32.gmra.mxu0 %v194
    %v215 = vpop.f32.mrf.mxu0
    %v216 = vadd.f32 0.0, %v215
    %217 = vdwg.mxu0
    %v218 = vmul.f32 %v216, 0.35355338
    %v219 = vsel %vm105, %v218, -inf
    %v220 = vsel %vm113, %v219, -inf
    %221 = vmax.xlane.f32.xlu0 %v220
    %v222 = vpop.xlane.xlu0 %221
    %v223 = vsub.f32 %v219, %v222
    %v224 = vmul.f32 %v223, 1.442695
    %v225 = vpow.pop %v224
    %v226 = vsel %vm113, %v225, 0.0
    %227 = vadd.xlane.f32.xlu0 %v226
    %v228 = vpop.xlane.xlu0 %227
    %v229 = vrcp.pop %v228
    %v230 = vmul.f32 %v228, %v229
    %v231 = vsub.f32 1.0, %v230
    %v232 = vmul.f32 %v229, %v231
    %v233 = vadd.f32 %v229, %v232
    %vm234 = vweird.f32 %v228
    %vm235 = vweird.f32 %v229
    %vm236 = vmor %vm234, %vm235
    %v237 = vsel %vm236, %v229, %v233
    %v238 = vand.u32 2147483647, %v228
    %vm239 = vcmp.eq.f32.partialorder %v238, 8.507059e+37
    %v240 = vand.u32 %v228, 2147483648
    %v241 = vor.u32 1.1754944e-38, %v240
    %v242 = vsel %vm239, %v241, %v237
    %v243 = vmul.f32 %v225, %v242
    %244 = vrot.lane.b32.xlu0 %v96, 56
    %v245 = vpop.permute.xlu0 %244
    %v248 = vsel %vm113, %v243, 0
    %250 = vmatpush.msra.mxu0 0.0
    %251 = vmatpush.msra.mxu0 0.0
    %252 = vmatpush.msra.mxu0 0.0
    %253 = vmatpush.msra.mxu0 0.0
    %254 = vmatpush.msra.mxu0 0.0
    %255 = vmatpush.msra.mxu0 0.0
    %256 = vmatpush.msra.mxu0 0.0
    %257 = vmatpush.msra.mxu0 0.0
    %258 = vmatpush.msra.mxu0 0.0
    %259 = vmatpush.msra.mxu0 0.0
    %260 = vmatpush.msra.mxu0 0.0
    %261 = vmatpush.msra.mxu0 0.0
    %262 = vmatpush.msra.mxu0 0.0
    %263 = vmatpush.msra.mxu0 0.0
    %264 = vmatpush.msra.mxu0 0.0
    %265 = vmatpush.msra.mxu0 %v245
    %266 = vmatmul.f32.gmra.mxu0 %v248
    %v267 = vpop.f32.mrf.mxu0
    %v268 = vadd.f32 0.0, %v267
    %269 = vdwg.mxu0
    %v271 = vsel %vm113, %v268, 0
    %273 = vmatpush.msra.mxu0 0.0
    %274 = vmatpush.msra.mxu0 0.0
    %275 = vmatpush.msra.mxu0 0.0
    %276 = vmatpush.msra.mxu0 0.0
    %277 = vmatpush.msra.mxu0 0.0
    %278 = vmatpush.msra.mxu0 0.0
    %279 = vmatpush.msra.mxu0 0.0
    %280 = vmatpush.msra.mxu0 0.0
    %281 = vmatpush.msra.mxu0 0.0
    %282 = vmatpush.msra.mxu0 0.0
    %283 = vmatpush.msra.mxu0 0.0
    %284 = vmatpush.msra.mxu0 0.0
    %285 = vmatpush.msra.mxu0 0.0
    %286 = vmatpush.msra.mxu0 0.0
    %287 = vmatpush.msra.mxu0 0.0
    %288 = vmatpush.msra.mxu0 %v107
    %289 = vmatmul.f32.gmra.mxu0 %v271
    %v290 = vpop.f32.mrf.mxu0
    %v291 = vadd.f32 0.0, %v290
    %292 = vdwg.mxu0
    %v294 = vsel %vm113, %v188, 0
    %296 = vmatpush.msra.mxu0 0.0
    %297 = vmatpush.msra.mxu0 0.0
    %298 = vmatpush.msra.mxu0 0.0
    %299 = vmatpush.msra.mxu0 0.0
    %300 = vmatpush.msra.mxu0 0.0
    %301 = vmatpush.msra.mxu0 0.0
    %302 = vmatpush.msra.mxu0 0.0
    %303 = vmatpush.msra.mxu0 0.0
    %304 = vmatpush.msra.mxu0 0.0
    %305 = vmatpush.msra.mxu0 0.0
    %306 = vmatpush.msra.mxu0 0.0
    %307 = vmatpush.msra.mxu0 0.0
    %308 = vmatpush.msra.mxu0 0.0
    %309 = vmatpush.msra.mxu0 0.0
    %310 = vmatpush.msra.mxu0 0.0
    %311 = vmatpush.msra.mxu0 %v106
    %312 = vmatmul.f32.gmra.mxu0 %v294
    %v313 = vpop.f32.mrf.mxu0
    %v314 = vadd.f32 %v291, %v313
    %315 = vdwg.mxu0
    %316 = vrot.lane.b32.xlu0 %v96, 112
    %v317 = vpop.permute.xlu0 %316
    %318 = vrot.lane.b32.xlu0 %v96, 80
    %v319 = vpop.permute.xlu0 %318
    %v320 = vsel %vm113, %v317, 0
    %v322 = vsel %vm113, %v319, 0
    %324 = vmatpush.xpose.msra.mxu0 0.0
    %325 = vmatpush.xpose.msra.mxu0 0.0
    %326 = vmatpush.xpose.msra.mxu0 0.0
    %327 = vmatpush.xpose.msra.mxu0 0.0
    %328 = vmatpush.xpose.msra.mxu0 0.0
    %329 = vmatpush.xpose.msra.mxu0 0.0
    %330 = vmatpush.xpose.msra.mxu0 0.0
    %331 = vmatpush.xpose.msra.mxu0 0.0
    %332 = vmatpush.xpose.msra.mxu0 0.0
    %333 = vmatpush.xpose.msra.mxu0 0.0
    %334 = vmatpush.xpose.msra.mxu0 0.0
    %335 = vmatpush.xpose.msra.mxu0 0.0
    %336 = vmatpush.xpose.msra.mxu0 0.0
    %337 = vmatpush.xpose.msra.mxu0 0.0
    %338 = vmatpush.xpose.msra.mxu0 0.0
    %339 = vmatpush.xpose.msra.mxu0 %v322
    %340 = vmatmul.f32.gmra.mxu0 %v320
    %v341 = vpop.f32.mrf.mxu0
    %v342 = vadd.f32 0.0, %v341
    %343 = vdwg.mxu0
    %v344 = vmul.f32 %v342, 0.35355338
    %v345 = vsel %vm105, %v344, -inf
    %v346 = vsel %vm113, %v345, -inf
    %347 = vmax.xlane.f32.xlu0 %v346
    %v348 = vpop.xlane.xlu0 %347
    %v349 = vsub.f32 %v345, %v348
    %v350 = vmul.f32 %v349, 1.442695
    %v351 = vpow.pop %v350
    %v352 = vsel %vm113, %v351, 0.0
    %353 = vadd.xlane.f32.xlu0 %v352
    %v354 = vpop.xlane.xlu0 %353
    %v355 = vrcp.pop %v354
    %v356 = vmul.f32 %v354, %v355
    %v357 = vsub.f32 1.0, %v356
    %v358 = vmul.f32 %v355, %v357
    %v359 = vadd.f32 %v355, %v358
    %vm360 = vweird.f32 %v354
    %vm361 = vweird.f32 %v355
    %vm362 = vmor %vm360, %vm361
    %v363 = vsel %vm362, %v355, %v359
    %v364 = vand.u32 2147483647, %v354
    %vm365 = vcmp.eq.f32.partialorder %v364, 8.507059e+37
    %v366 = vand.u32 %v354, 2147483648
    %v367 = vor.u32 1.1754944e-38, %v366
    %v368 = vsel %vm365, %v367, %v363
    %v369 = vmul.f32 %v351, %v368
    %370 = vrot.lane.b32.xlu0 %v96, 48
    %v371 = vpop.permute.xlu0 %370
    %v374 = vsel %vm113, %v369, 0
    %376 = vmatpush.msra.mxu0 0.0
    %377 = vmatpush.msra.mxu0 0.0
    %378 = vmatpush.msra.mxu0 0.0
    %379 = vmatpush.msra.mxu0 0.0
    %380 = vmatpush.msra.mxu0 0.0
    %381 = vmatpush.msra.mxu0 0.0
    %382 = vmatpush.msra.mxu0 0.0
    %383 = vmatpush.msra.mxu0 0.0
    %384 = vmatpush.msra.mxu0 0.0
    %385 = vmatpush.msra.mxu0 0.0
    %386 = vmatpush.msra.mxu0 0.0
    %387 = vmatpush.msra.mxu0 0.0
    %388 = vmatpush.msra.mxu0 0.0
    %389 = vmatpush.msra.mxu0 0.0
    %390 = vmatpush.msra.mxu0 0.0
    %391 = vmatpush.msra.mxu0 %v371
    %392 = vmatmul.f32.gmra.mxu0 %v374
    %v393 = vpop.f32.mrf.mxu0
    %v394 = vadd.f32 0.0, %v393
    %395 = vdwg.mxu0
    %v397 = vsel %vm113, %v394, 0
    %399 = vmatpush.msra.mxu0 0.0
    %400 = vmatpush.msra.mxu0 0.0
    %401 = vmatpush.msra.mxu0 0.0
    %402 = vmatpush.msra.mxu0 0.0
    %403 = vmatpush.msra.mxu0 0.0
    %404 = vmatpush.msra.mxu0 0.0
    %405 = vmatpush.msra.mxu0 0.0
    %406 = vmatpush.msra.mxu0 0.0
    %407 = vmatpush.msra.mxu0 0.0
    %408 = vmatpush.msra.mxu0 0.0
    %409 = vmatpush.msra.mxu0 0.0
    %410 = vmatpush.msra.mxu0 0.0
    %411 = vmatpush.msra.mxu0 0.0
    %412 = vmatpush.msra.mxu0 0.0
    %413 = vmatpush.msra.mxu0 0.0
    %414 = vmatpush.msra.mxu0 %v108
    %415 = vmatmul.f32.gmra.mxu0 %v397
    %v416 = vpop.f32.mrf.mxu0
    %v417 = vadd.f32 0.0, %v416
    %418 = vdwg.mxu0
    %v419 = vadd.f32 %v314, %v417
    %420 = vrot.lane.b32.xlu0 %v96, 104
    %v421 = vpop.permute.xlu0 %420
    %422 = vrot.lane.b32.xlu0 %v96, 72
    %v423 = vpop.permute.xlu0 %422
    %v424 = vsel %vm113, %v421, 0
    %v426 = vsel %vm113, %v423, 0
    %428 = vmatpush.xpose.msra.mxu0 0.0
    %429 = vmatpush.xpose.msra.mxu0 0.0
    %430 = vmatpush.xpose.msra.mxu0 0.0
    %431 = vmatpush.xpose.msra.mxu0 0.0
    %432 = vmatpush.xpose.msra.mxu0 0.0
    %433 = vmatpush.xpose.msra.mxu0 0.0
    %434 = vmatpush.xpose.msra.mxu0 0.0
    %435 = vmatpush.xpose.msra.mxu0 0.0
    %436 = vmatpush.xpose.msra.mxu0 0.0
    %437 = vmatpush.xpose.msra.mxu0 0.0
    %438 = vmatpush.xpose.msra.mxu0 0.0
    %439 = vmatpush.xpose.msra.mxu0 0.0
    %440 = vmatpush.xpose.msra.mxu0 0.0
    %441 = vmatpush.xpose.msra.mxu0 0.0
    %442 = vmatpush.xpose.msra.mxu0 0.0
    %443 = vmatpush.xpose.msra.mxu0 %v426
    %444 = vmatmul.f32.gmra.mxu0 %v424
    %v445 = vpop.f32.mrf.mxu0
    %v446 = vadd.f32 0.0, %v445
    %447 = vdwg.mxu0
    %v448 = vmul.f32 %v446, 0.35355338
    %v449 = vsel %vm105, %v448, -inf
    %v450 = vsel %vm113, %v449, -inf
    %451 = vmax.xlane.f32.xlu0 %v450
    %v452 = vpop.xlane.xlu0 %451
    %v453 = vsub.f32 %v449, %v452
    %v454 = vmul.f32 %v453, 1.442695
    %v455 = vpow.pop %v454
    %v456 = vsel %vm113, %v455, 0.0
    %457 = vadd.xlane.f32.xlu0 %v456
    %v458 = vpop.xlane.xlu0 %457
    %v459 = vrcp.pop %v458
    %v460 = vmul.f32 %v458, %v459
    %v461 = vsub.f32 1.0, %v460
    %v462 = vmul.f32 %v459, %v461
    %v463 = vadd.f32 %v459, %v462
    %vm464 = vweird.f32 %v458
    %vm465 = vweird.f32 %v459
    %vm466 = vmor %vm464, %vm465
    %v467 = vsel %vm466, %v459, %v463
    %v468 = vand.u32 2147483647, %v458
    %vm469 = vcmp.eq.f32.partialorder %v468, 8.507059e+37
    %v470 = vand.u32 %v458, 2147483648
    %v471 = vor.u32 1.1754944e-38, %v470
    %v472 = vsel %vm469, %v471, %v467
    %v473 = vmul.f32 %v455, %v472
    %474 = vrot.lane.b32.xlu0 %v96, 40
    %v475 = vpop.permute.xlu0 %474
    %v478 = vsel %vm113, %v473, 0
    %480 = vmatpush.msra.mxu0 0.0
    %481 = vmatpush.msra.mxu0 0.0
    %482 = vmatpush.msra.mxu0 0.0
    %483 = vmatpush.msra.mxu0 0.0
    %484 = vmatpush.msra.mxu0 0.0
    %485 = vmatpush.msra.mxu0 0.0
    %486 = vmatpush.msra.mxu0 0.0
    %487 = vmatpush.msra.mxu0 0.0
    %488 = vmatpush.msra.mxu0 0.0
    %489 = vmatpush.msra.mxu0 0.0
    %490 = vmatpush.msra.mxu0 0.0
    %491 = vmatpush.msra.mxu0 0.0
    %492 = vmatpush.msra.mxu0 0.0
    %493 = vmatpush.msra.mxu0 0.0
    %494 = vmatpush.msra.mxu0 0.0
    %495 = vmatpush.msra.mxu0 %v475
    %496 = vmatmul.f32.gmra.mxu0 %v478
    %v497 = vpop.f32.mrf.mxu0
    %v498 = vadd.f32 0.0, %v497
    %499 = vdwg.mxu0
    %v501 = vsel %vm113, %v498, 0
    %503 = vmatpush.msra.mxu0 0.0
    %504 = vmatpush.msra.mxu0 0.0
    %505 = vmatpush.msra.mxu0 0.0
    %506 = vmatpush.msra.mxu0 0.0
    %507 = vmatpush.msra.mxu0 0.0
    %508 = vmatpush.msra.mxu0 0.0
    %509 = vmatpush.msra.mxu0 0.0
    %510 = vmatpush.msra.mxu0 0.0
    %511 = vmatpush.msra.mxu0 0.0
    %512 = vmatpush.msra.mxu0 0.0
    %513 = vmatpush.msra.mxu0 0.0
    %514 = vmatpush.msra.mxu0 0.0
    %515 = vmatpush.msra.mxu0 0.0
    %516 = vmatpush.msra.mxu0 0.0
    %517 = vmatpush.msra.mxu0 0.0
    %518 = vmatpush.msra.mxu0 %v109
    %519 = vmatmul.f32.gmra.mxu0 %v501
    %v520 = vpop.f32.mrf.mxu0
    %v521 = vadd.f32 0.0, %v520
    %522 = vdwg.mxu0
    %v523 = vadd.f32 %v419, %v521
    %525 = vrot.lane.b32.xlu0 %v99, 96
    %v526 = vpop.permute.xlu0 %525
    %v527 = vsel %vm113, %v99, 0
    %v529 = vsel %vm113, %v526, 0
    %531 = vmatpush.xpose.msra.mxu0 0.0
    %532 = vmatpush.xpose.msra.mxu0 0.0
    %533 = vmatpush.xpose.msra.mxu0 0.0
    %534 = vmatpush.xpose.msra.mxu0 0.0
    %535 = vmatpush.xpose.msra.mxu0 0.0
    %536 = vmatpush.xpose.msra.mxu0 0.0
    %537 = vmatpush.xpose.msra.mxu0 0.0
    %538 = vmatpush.xpose.msra.mxu0 0.0
    %539 = vmatpush.xpose.msra.mxu0 0.0
    %540 = vmatpush.xpose.msra.mxu0 0.0
    %541 = vmatpush.xpose.msra.mxu0 0.0
    %542 = vmatpush.xpose.msra.mxu0 0.0
    %543 = vmatpush.xpose.msra.mxu0 0.0
    %544 = vmatpush.xpose.msra.mxu0 0.0
    %545 = vmatpush.xpose.msra.mxu0 0.0
    %546 = vmatpush.xpose.msra.mxu0 %v529
    %547 = vmatmul.f32.gmra.mxu0 %v527
    %v548 = vpop.f32.mrf.mxu0
    %v549 = vadd.f32 0.0, %v548
    %550 = vdwg.mxu0
    %v551 = vmul.f32 %v549, 0.35355338
    %v552 = vsel %vm105, %v551, -inf
    %v553 = vsel %vm113, %v552, -inf
    %554 = vmax.xlane.f32.xlu0 %v553
    %v555 = vpop.xlane.xlu0 %554
    %v556 = vsub.f32 %v552, %v555
    %v557 = vmul.f32 %v556, 1.442695
    %v558 = vpow.pop %v557
    %v559 = vsel %vm113, %v558, 0.0
    %560 = vadd.xlane.f32.xlu0 %v559
    %v561 = vpop.xlane.xlu0 %560
    %v562 = vrcp.pop %v561
    %v563 = vmul.f32 %v561, %v562
    %v564 = vsub.f32 1.0, %v563
    %v565 = vmul.f32 %v562, %v564
    %v566 = vadd.f32 %v562, %v565
    %vm567 = vweird.f32 %v561
    %vm568 = vweird.f32 %v562
    %vm569 = vmor %vm567, %vm568
    %v570 = vsel %vm569, %v562, %v566
    %v571 = vand.u32 2147483647, %v561
    %vm572 = vcmp.eq.f32.partialorder %v571, 8.507059e+37
    %v573 = vand.u32 %v561, 2147483648
    %v574 = vor.u32 1.1754944e-38, %v573
    %v575 = vsel %vm572, %v574, %v570
    %v576 = vmul.f32 %v558, %v575
    %577 = vrot.lane.b32.xlu0 %v99, 64
    %v578 = vpop.permute.xlu0 %577
    %v581 = vsel %vm113, %v576, 0
    %583 = vmatpush.msra.mxu0 0.0
    %584 = vmatpush.msra.mxu0 0.0
    %585 = vmatpush.msra.mxu0 0.0
    %586 = vmatpush.msra.mxu0 0.0
    %587 = vmatpush.msra.mxu0 0.0
    %588 = vmatpush.msra.mxu0 0.0
    %589 = vmatpush.msra.mxu0 0.0
    %590 = vmatpush.msra.mxu0 0.0
    %591 = vmatpush.msra.mxu0 0.0
    %592 = vmatpush.msra.mxu0 0.0
    %593 = vmatpush.msra.mxu0 0.0
    %594 = vmatpush.msra.mxu0 0.0
    %595 = vmatpush.msra.mxu0 0.0
    %596 = vmatpush.msra.mxu0 0.0
    %597 = vmatpush.msra.mxu0 0.0
    %598 = vmatpush.msra.mxu0 %v578
    %599 = vmatmul.f32.gmra.mxu0 %v581
    %v600 = vpop.f32.mrf.mxu0
    %v601 = vadd.f32 0.0, %v600
    %602 = vdwg.mxu0
    %603 = vrot.lane.b32.xlu0 %v99, 120
    %v604 = vpop.permute.xlu0 %603
    %605 = vrot.lane.b32.xlu0 %v99, 88
    %v606 = vpop.permute.xlu0 %605
    %v607 = vsel %vm113, %v604, 0
    %v609 = vsel %vm113, %v606, 0
    %611 = vmatpush.xpose.msra.mxu0 0.0
    %612 = vmatpush.xpose.msra.mxu0 0.0
    %613 = vmatpush.xpose.msra.mxu0 0.0
    %614 = vmatpush.xpose.msra.mxu0 0.0
    %615 = vmatpush.xpose.msra.mxu0 0.0
    %616 = vmatpush.xpose.msra.mxu0 0.0
    %617 = vmatpush.xpose.msra.mxu0 0.0
    %618 = vmatpush.xpose.msra.mxu0 0.0
    %619 = vmatpush.xpose.msra.mxu0 0.0
    %620 = vmatpush.xpose.msra.mxu0 0.0
    %621 = vmatpush.xpose.msra.mxu0 0.0
    %622 = vmatpush.xpose.msra.mxu0 0.0
    %623 = vmatpush.xpose.msra.mxu0 0.0
    %624 = vmatpush.xpose.msra.mxu0 0.0
    %625 = vmatpush.xpose.msra.mxu0 0.0
    %626 = vmatpush.xpose.msra.mxu0 %v609
    %627 = vmatmul.f32.gmra.mxu0 %v607
    %v628 = vpop.f32.mrf.mxu0
    %v629 = vadd.f32 0.0, %v628
    %630 = vdwg.mxu0
    %v631 = vmul.f32 %v629, 0.35355338
    %v632 = vsel %vm105, %v631, -inf
    %v633 = vsel %vm113, %v632, -inf
    %634 = vmax.xlane.f32.xlu0 %v633
    %v635 = vpop.xlane.xlu0 %634
    %v636 = vsub.f32 %v632, %v635
    %v637 = vmul.f32 %v636, 1.442695
    %v638 = vpow.pop %v637
    %v639 = vsel %vm113, %v638, 0.0
    %640 = vadd.xlane.f32.xlu0 %v639
    %v641 = vpop.xlane.xlu0 %640
    %v642 = vrcp.pop %v641
    %v643 = vmul.f32 %v641, %v642
    %v644 = vsub.f32 1.0, %v643
    %v645 = vmul.f32 %v642, %v644
    %v646 = vadd.f32 %v642, %v645
    %vm647 = vweird.f32 %v641
    %vm648 = vweird.f32 %v642
    %vm649 = vmor %vm647, %vm648
    %v650 = vsel %vm649, %v642, %v646
    %v651 = vand.u32 2147483647, %v641
    %vm652 = vcmp.eq.f32.partialorder %v651, 8.507059e+37
    %v653 = vand.u32 %v641, 2147483648
    %v654 = vor.u32 1.1754944e-38, %v653
    %v655 = vsel %vm652, %v654, %v650
    %v656 = vmul.f32 %v638, %v655
    %657 = vrot.lane.b32.xlu0 %v99, 56
    %v658 = vpop.permute.xlu0 %657
    %v661 = vsel %vm113, %v656, 0
    %663 = vmatpush.msra.mxu0 0.0
    %664 = vmatpush.msra.mxu0 0.0
    %665 = vmatpush.msra.mxu0 0.0
    %666 = vmatpush.msra.mxu0 0.0
    %667 = vmatpush.msra.mxu0 0.0
    %668 = vmatpush.msra.mxu0 0.0
    %669 = vmatpush.msra.mxu0 0.0
    %670 = vmatpush.msra.mxu0 0.0
    %671 = vmatpush.msra.mxu0 0.0
    %672 = vmatpush.msra.mxu0 0.0
    %673 = vmatpush.msra.mxu0 0.0
    %674 = vmatpush.msra.mxu0 0.0
    %675 = vmatpush.msra.mxu0 0.0
    %676 = vmatpush.msra.mxu0 0.0
    %677 = vmatpush.msra.mxu0 0.0
    %678 = vmatpush.msra.mxu0 %v658
    %679 = vmatmul.f32.gmra.mxu0 %v661
    %v680 = vpop.f32.mrf.mxu0
    %v681 = vadd.f32 0.0, %v680
    %682 = vdwg.mxu0
    %v684 = vsel %vm113, %v681, 0
    %686 = vmatpush.msra.mxu0 0.0
    %687 = vmatpush.msra.mxu0 0.0
    %688 = vmatpush.msra.mxu0 0.0
    %689 = vmatpush.msra.mxu0 0.0
    %690 = vmatpush.msra.mxu0 0.0
    %691 = vmatpush.msra.mxu0 0.0
    %692 = vmatpush.msra.mxu0 0.0
    %693 = vmatpush.msra.mxu0 0.0
    %694 = vmatpush.msra.mxu0 0.0
    %695 = vmatpush.msra.mxu0 0.0
    %696 = vmatpush.msra.mxu0 0.0
    %697 = vmatpush.msra.mxu0 0.0
    %698 = vmatpush.msra.mxu0 0.0
    %699 = vmatpush.msra.mxu0 0.0
    %700 = vmatpush.msra.mxu0 0.0
    %701 = vmatpush.msra.mxu0 %v107
    %702 = vmatmul.f32.gmra.mxu0 %v684
    %v703 = vpop.f32.mrf.mxu0
    %v704 = vadd.f32 0.0, %v703
    %705 = vdwg.mxu0
    %v707 = vsel %vm113, %v601, 0
    %709 = vmatpush.msra.mxu0 0.0
    %710 = vmatpush.msra.mxu0 0.0
    %711 = vmatpush.msra.mxu0 0.0
    %712 = vmatpush.msra.mxu0 0.0
    %713 = vmatpush.msra.mxu0 0.0
    %714 = vmatpush.msra.mxu0 0.0
    %715 = vmatpush.msra.mxu0 0.0
    %716 = vmatpush.msra.mxu0 0.0
    %717 = vmatpush.msra.mxu0 0.0
    %718 = vmatpush.msra.mxu0 0.0
    %719 = vmatpush.msra.mxu0 0.0
    %720 = vmatpush.msra.mxu0 0.0
    %721 = vmatpush.msra.mxu0 0.0
    %722 = vmatpush.msra.mxu0 0.0
    %723 = vmatpush.msra.mxu0 0.0
    %724 = vmatpush.msra.mxu0 %v106
    %725 = vmatmul.f32.gmra.mxu0 %v707
    %v726 = vpop.f32.mrf.mxu0
    %v727 = vadd.f32 %v704, %v726
    %728 = vdwg.mxu0
    %729 = vrot.lane.b32.xlu0 %v99, 112
    %v730 = vpop.permute.xlu0 %729
    %731 = vrot.lane.b32.xlu0 %v99, 80
    %v732 = vpop.permute.xlu0 %731
    %v733 = vsel %vm113, %v730, 0
    %v735 = vsel %vm113, %v732, 0
    %737 = vmatpush.xpose.msra.mxu0 0.0
    %738 = vmatpush.xpose.msra.mxu0 0.0
    %739 = vmatpush.xpose.msra.mxu0 0.0
    %740 = vmatpush.xpose.msra.mxu0 0.0
    %741 = vmatpush.xpose.msra.mxu0 0.0
    %742 = vmatpush.xpose.msra.mxu0 0.0
    %743 = vmatpush.xpose.msra.mxu0 0.0
    %744 = vmatpush.xpose.msra.mxu0 0.0
    %745 = vmatpush.xpose.msra.mxu0 0.0
    %746 = vmatpush.xpose.msra.mxu0 0.0
    %747 = vmatpush.xpose.msra.mxu0 0.0
    %748 = vmatpush.xpose.msra.mxu0 0.0
    %749 = vmatpush.xpose.msra.mxu0 0.0
    %750 = vmatpush.xpose.msra.mxu0 0.0
    %751 = vmatpush.xpose.msra.mxu0 0.0
    %752 = vmatpush.xpose.msra.mxu0 %v735
    %753 = vmatmul.f32.gmra.mxu0 %v733
    %v754 = vpop.f32.mrf.mxu0
    %v755 = vadd.f32 0.0, %v754
    %756 = vdwg.mxu0
    %v757 = vmul.f32 %v755, 0.35355338
    %v758 = vsel %vm105, %v757, -inf
    %v759 = vsel %vm113, %v758, -inf
    %760 = vmax.xlane.f32.xlu0 %v759
    %v761 = vpop.xlane.xlu0 %760
    %v762 = vsub.f32 %v758, %v761
    %v763 = vmul.f32 %v762, 1.442695
    %v764 = vpow.pop %v763
    %v765 = vsel %vm113, %v764, 0.0
    %766 = vadd.xlane.f32.xlu0 %v765
    %v767 = vpop.xlane.xlu0 %766
    %v768 = vrcp.pop %v767
    %v769 = vmul.f32 %v767, %v768
    %v770 = vsub.f32 1.0, %v769
    %v771 = vmul.f32 %v768, %v770
    %v772 = vadd.f32 %v768, %v771
    %vm773 = vweird.f32 %v767
    %vm774 = vweird.f32 %v768
    %vm775 = vmor %vm773, %vm774
    %v776 = vsel %vm775, %v768, %v772
    %v777 = vand.u32 2147483647, %v767
    %vm778 = vcmp.eq.f32.partialorder %v777, 8.507059e+37
    %v779 = vand.u32 %v767, 2147483648
    %v780 = vor.u32 1.1754944e-38, %v779
    %v781 = vsel %vm778, %v780, %v776
    %v782 = vmul.f32 %v764, %v781
    %783 = vrot.lane.b32.xlu0 %v99, 48
    %v784 = vpop.permute.xlu0 %783
    %v787 = vsel %vm113, %v782, 0
    %789 = vmatpush.msra.mxu0 0.0
    %790 = vmatpush.msra.mxu0 0.0
    %791 = vmatpush.msra.mxu0 0.0
    %792 = vmatpush.msra.mxu0 0.0
    %793 = vmatpush.msra.mxu0 0.0
    %794 = vmatpush.msra.mxu0 0.0
    %795 = vmatpush.msra.mxu0 0.0
    %796 = vmatpush.msra.mxu0 0.0
    %797 = vmatpush.msra.mxu0 0.0
    %798 = vmatpush.msra.mxu0 0.0
    %799 = vmatpush.msra.mxu0 0.0
    %800 = vmatpush.msra.mxu0 0.0
    %801 = vmatpush.msra.mxu0 0.0
    %802 = vmatpush.msra.mxu0 0.0
    %803 = vmatpush.msra.mxu0 0.0
    %804 = vmatpush.msra.mxu0 %v784
    %805 = vmatmul.f32.gmra.mxu0 %v787
    %v806 = vpop.f32.mrf.mxu0
    %v807 = vadd.f32 0.0, %v806
    %808 = vdwg.mxu0
    %v810 = vsel %vm113, %v807, 0
    %812 = vmatpush.msra.mxu0 0.0
    %813 = vmatpush.msra.mxu0 0.0
    %814 = vmatpush.msra.mxu0 0.0
    %815 = vmatpush.msra.mxu0 0.0
    %816 = vmatpush.msra.mxu0 0.0
    %817 = vmatpush.msra.mxu0 0.0
    %818 = vmatpush.msra.mxu0 0.0
    %819 = vmatpush.msra.mxu0 0.0
    %820 = vmatpush.msra.mxu0 0.0
    %821 = vmatpush.msra.mxu0 0.0
    %822 = vmatpush.msra.mxu0 0.0
    %823 = vmatpush.msra.mxu0 0.0
    %824 = vmatpush.msra.mxu0 0.0
    %825 = vmatpush.msra.mxu0 0.0
    %826 = vmatpush.msra.mxu0 0.0
    %827 = vmatpush.msra.mxu0 %v108
    %828 = vmatmul.f32.gmra.mxu0 %v810
    %v829 = vpop.f32.mrf.mxu0
    %v830 = vadd.f32 0.0, %v829
    %831 = vdwg.mxu0
    %v832 = vadd.f32 %v727, %v830
    %833 = vrot.lane.b32.xlu0 %v99, 104
    %v834 = vpop.permute.xlu0 %833
    %835 = vrot.lane.b32.xlu0 %v99, 72
    %v836 = vpop.permute.xlu0 %835
    %v837 = vsel %vm113, %v834, 0
    %v839 = vsel %vm113, %v836, 0
    %841 = vmatpush.xpose.msra.mxu0 0.0
    %842 = vmatpush.xpose.msra.mxu0 0.0
    %843 = vmatpush.xpose.msra.mxu0 0.0
    %844 = vmatpush.xpose.msra.mxu0 0.0
    %845 = vmatpush.xpose.msra.mxu0 0.0
    %846 = vmatpush.xpose.msra.mxu0 0.0
    %847 = vmatpush.xpose.msra.mxu0 0.0
    %848 = vmatpush.xpose.msra.mxu0 0.0
    %849 = vmatpush.xpose.msra.mxu0 0.0
    %850 = vmatpush.xpose.msra.mxu0 0.0
    %851 = vmatpush.xpose.msra.mxu0 0.0
    %852 = vmatpush.xpose.msra.mxu0 0.0
    %853 = vmatpush.xpose.msra.mxu0 0.0
    %854 = vmatpush.xpose.msra.mxu0 0.0
    %855 = vmatpush.xpose.msra.mxu0 0.0
    %856 = vmatpush.xpose.msra.mxu0 %v839
    %857 = vmatmul.f32.gmra.mxu0 %v837
    %v858 = vpop.f32.mrf.mxu0
    %v859 = vadd.f32 0.0, %v858
    %860 = vdwg.mxu0
    %v861 = vmul.f32 %v859, 0.35355338
    %v862 = vsel %vm105, %v861, -inf
    %v863 = vsel %vm113, %v862, -inf
    %864 = vmax.xlane.f32.xlu0 %v863
    %v865 = vpop.xlane.xlu0 %864
    %v866 = vsub.f32 %v862, %v865
    %v867 = vmul.f32 %v866, 1.442695
    %v868 = vpow.pop %v867
    %v869 = vsel %vm113, %v868, 0.0
    %870 = vadd.xlane.f32.xlu0 %v869
    %v871 = vpop.xlane.xlu0 %870
    %v872 = vrcp.pop %v871
    %v873 = vmul.f32 %v871, %v872
    %v874 = vsub.f32 1.0, %v873
    %v875 = vmul.f32 %v872, %v874
    %v876 = vadd.f32 %v872, %v875
    %vm877 = vweird.f32 %v871
    %vm878 = vweird.f32 %v872
    %vm879 = vmor %vm877, %vm878
    %v880 = vsel %vm879, %v872, %v876
    %v881 = vand.u32 2147483647, %v871
    %vm882 = vcmp.eq.f32.partialorder %v881, 8.507059e+37
    %v883 = vand.u32 %v871, 2147483648
    %v884 = vor.u32 1.1754944e-38, %v883
    %v885 = vsel %vm882, %v884, %v880
    %v886 = vmul.f32 %v868, %v885
    %887 = vrot.lane.b32.xlu0 %v99, 40
    %v888 = vpop.permute.xlu0 %887
    %v891 = vsel %vm113, %v886, 0
    %893 = vmatpush.msra.mxu0 0.0
    %894 = vmatpush.msra.mxu0 0.0
    %895 = vmatpush.msra.mxu0 0.0
    %896 = vmatpush.msra.mxu0 0.0
    %897 = vmatpush.msra.mxu0 0.0
    %898 = vmatpush.msra.mxu0 0.0
    %899 = vmatpush.msra.mxu0 0.0
    %900 = vmatpush.msra.mxu0 0.0
    %901 = vmatpush.msra.mxu0 0.0
    %902 = vmatpush.msra.mxu0 0.0
    %903 = vmatpush.msra.mxu0 0.0
    %904 = vmatpush.msra.mxu0 0.0
    %905 = vmatpush.msra.mxu0 0.0
    %906 = vmatpush.msra.mxu0 0.0
    %907 = vmatpush.msra.mxu0 0.0
    %908 = vmatpush.msra.mxu0 %v888
    %909 = vmatmul.f32.gmra.mxu0 %v891
    %v910 = vpop.f32.mrf.mxu0
    %v911 = vadd.f32 0.0, %v910
    %912 = vdwg.mxu0
    %v914 = vsel %vm113, %v911, 0
    %916 = vmatpush.msra.mxu0 0.0
    %917 = vmatpush.msra.mxu0 0.0
    %918 = vmatpush.msra.mxu0 0.0
    %919 = vmatpush.msra.mxu0 0.0
    %920 = vmatpush.msra.mxu0 0.0
    %921 = vmatpush.msra.mxu0 0.0
    %922 = vmatpush.msra.mxu0 0.0
    %923 = vmatpush.msra.mxu0 0.0
    %924 = vmatpush.msra.mxu0 0.0
    %925 = vmatpush.msra.mxu0 0.0
    %926 = vmatpush.msra.mxu0 0.0
    %927 = vmatpush.msra.mxu0 0.0
    %928 = vmatpush.msra.mxu0 0.0
    %929 = vmatpush.msra.mxu0 0.0
    %930 = vmatpush.msra.mxu0 0.0
    %931 = vmatpush.msra.mxu0 %v109
    %932 = vmatmul.f32.gmra.mxu0 %v914
    %v933 = vpop.f32.mrf.mxu0
    %v934 = vadd.f32 0.0, %v933
    %935 = vdwg.mxu0
    %v936 = vadd.f32 %v832, %v934
    %v937 = vld [vmem:[%s3] sm:$0x1]
    %v939 = vperm.slane %v937, 0
    %v941 = vadd.f32 %v523, %v939
    %v942 = vadd.f32 %v936, %v939
    %943 = vst.msk [vmem:[#allocation8] sm:$0xff] %vm71, %v941
    %944 = vst.msk [vmem:[#allocation8 + $0x8] sm:$0xff] %vm71, %v942
    // Predicated region
    $region30: #{tpu_custom_call.1} parent=1 // pred_check
      _
    $region31: #{tpu_custom_call.1} parent=1 // pred_check_branch
      %946 = sbr.rel (0) target = $region33
    $region32: #{tpu_custom_call.1} parent=1 // pred_region
      %948 = vsyncadd [#allocation4], 0
      %s949 = sshll.u32 [#allocation8], 4
      %s950 = int_to_ptr.vmem [resolvable:$true] %s949
      %s951 = sshll.u32 %s4, 4
      %s952 = int_to_ptr.hbm [resolvable:$true] %s951
      %957 = dma.vmem_to_hbm [thread:$0]  %s950, 256, %s952, [#allocation4], 128, 128, 8
    $region33: #{tpu_custom_call.1} parent=1 // pred_fallthru
      _
    // Predicated region
    $region34: #{tpu_custom_call.1} parent=1 // pred_check
      _
    $region35: #{tpu_custom_call.1} parent=1 // pred_check_branch
      %959 = sbr.rel (0) target = $region37
    $region36: #{tpu_custom_call.1} parent=1 // pred_region
      %961 = dma.done [#allocation4], 256
    $region37: #{tpu_custom_call.1} parent=1 // pred_fallthru
      _
    %962 = vsyncpa [#allocation3], 1
    %963 = vsyncpa [#allocation6], 1
    %964 = vsyncpa [#allocation4], 1

</llo_original>
